<compile_context>
chip_gen: v5e
topology: v5e:2x2
jax: 0.10.0
libtpu: 0.0.40
codegen_flags: <defaults>
</compile_context>

<pallas_src>
import functools

import jax
import jax.numpy as jnp
from jax import lax
from jax.experimental import pallas as pl
from jax.experimental.pallas import tpu as pltpu


_NEG_SLOPE = 0.01  # torch.nn.LeakyReLU() default negative_slope

# Contract both operands on their last dim: result = a @ b.T (NT matmul).
_NT = (((1,), (1,)), ((), ()))


def _leaky_relu(x):
    return jnp.where(x > 0, x, _NEG_SLOPE * x)


def _round_up(n, m):
    return ((n + m - 1) // m) * m


def classifier_kernel(x_ref,
                      w1_ref, b1_ref,
                      w2_ref, b2_ref,
                      w3_ref, b3_ref,
                      w4_ref, b4_ref,
                      out_ref):
    """One batch tile, fully fused 4-layer MLP, batch-major throughout.

    x_ref:   (block_b, X_dim)
    w*_ref:  (out, in)   -- native nn.Linear layout, used via NT matmuls
    b*_ref:  (1, out)    -- broadcasts over the batch (sublane) axis
    out_ref: (block_b, c_dim)
    """
    h = lax.dot_general(x_ref[...], w1_ref[...], _NT,
                        preferred_element_type=jnp.float32) + b1_ref[...]
    h = _leaky_relu(h)

    h = lax.dot_general(h, w2_ref[...], _NT,
                        preferred_element_type=jnp.float32) + b2_ref[...]
    h = _leaky_relu(h)

    h = lax.dot_general(h, w3_ref[...], _NT,
                        preferred_element_type=jnp.float32) + b3_ref[...]
    h = _leaky_relu(h)

    out = lax.dot_general(h, w4_ref[...], _NT,
                          preferred_element_type=jnp.float32) + b4_ref[...]
    out_ref[...] = out.astype(out_ref.dtype)


def _choose_block_b(B, cap=2048):
    """Large, 128-aligned batch tile.

    cap=2048 amortizes the ~0.35us/step grid overhead while keeping the
    intermediate (block_b, h_dim) activations small even at h_dim=512
    (well under the scoped-VMEM limit, including v7x's 64 MiB).  For B > 128
    we keep at least two grid steps so the "parallel" axis can shard across
    the two TensorCores on v7x.
    """
    if B <= 128:
        return 128
    return min(cap, _round_up((B + 1) // 2, 128))


@functools.partial(jax.jit, static_argnames=("block_b",))
def classifier_forward(x, params, block_b=None):
    """Fused MLP forward.

    x:      (B, X_dim) float32
    params: dict with w1..w4 of shape (out, in) (PyTorch nn.Linear layout)
            and b1..b4 of shape (1, out).
    Returns (B, c_dim) float32, matching the PyTorch module.
    """
    B, X_dim = x.shape
    h_dim = params["w1"].shape[0]
    c_dim = params["w4"].shape[0]

    if block_b is None:
        block_b = _choose_block_b(B)
    Bp = _round_up(B, block_b)
    grid = (Bp // block_b,)

    # Pad only along the batch axis when ragged; no copy at all when aligned.
    x_in = x if Bp == B else jnp.pad(x, ((0, Bp - B), (0, 0)))

    full = lambda shape: pl.BlockSpec(shape, lambda i: (0, 0))

    grid_spec = pl.GridSpec(
        grid=grid,
        in_specs=[
            pl.BlockSpec((block_b, X_dim), lambda i: (i, 0)),   # x tile
            full((h_dim, X_dim)), full((1, h_dim)),             # layer 1
            full((h_dim, h_dim)), full((1, h_dim)),             # layer 2
            full((h_dim, h_dim)), full((1, h_dim)),             # layer 3
            full((c_dim, h_dim)), full((1, c_dim)),             # layer 4
        ],
        out_specs=pl.BlockSpec((block_b, c_dim), lambda i: (i, 0)),
    )

    flops = 2 * Bp * (X_dim * h_dim + 2 * h_dim * h_dim + h_dim * c_dim)
    weight_bytes = 4 * (h_dim * X_dim + 2 * h_dim * h_dim + c_dim * h_dim
                        + 3 * h_dim + c_dim)
    bytes_accessed = 4 * Bp * (X_dim + c_dim) + weight_bytes

    out = pl.pallas_call(
        classifier_kernel,
        out_shape=jax.ShapeDtypeStruct((Bp, c_dim), jnp.float32),
        grid_spec=grid_spec,
        compiler_params=pltpu.CompilerParams(
            dimension_semantics=("parallel",)),
        cost_estimate=pl.CostEstimate(
            flops=flops, transcendentals=0, bytes_accessed=bytes_accessed),
    )(x_in,
      params["w1"], params["b1"],
      params["w2"], params["b2"],
      params["w3"], params["b3"],
      params["w4"], params["b4"])

    return out if Bp == B else out[:B]


def init_classifier_params(key, x_dim, h_dim, c_dim):
    """Mirror weight_init: kaiming_normal_ (fan_in, gain=sqrt(2)) on weights,
    default nn.Linear U(-1/sqrt(fan_in), 1/sqrt(fan_in)) on biases.
    Weights use the PyTorch (out, in) layout; biases are (1, out)."""
    dims = [(x_dim, h_dim), (h_dim, h_dim), (h_dim, h_dim), (h_dim, c_dim)]
    params = {}
    for idx, (fan_in, fan_out) in enumerate(dims, start=1):
        key, kw, kb = jax.random.split(key, 3)
        std = (2.0 / fan_in) ** 0.5
        params[f"w{idx}"] = std * jax.random.normal(
            kw, (fan_out, fan_in), dtype=jnp.float32)
        bound = 1.0 / (fan_in ** 0.5)
        params[f"b{idx}"] = jax.random.uniform(
            kb, (1, fan_out), dtype=jnp.float32, minval=-bound, maxval=bound)
    return params


def classifier_reference(x, params):
    """Pure-JAX reference (x: (B, X_dim) row-major, PyTorch semantics)."""
    h = _leaky_relu(x @ params["w1"].T + params["b1"])
    h = _leaky_relu(h @ params["w2"].T + params["b2"])
    h = _leaky_relu(h @ params["w3"].T + params["b3"])
    return h @ params["w4"].T + params["b4"]


if __name__ == "__main__":
    # Small shapes consistent with the module: X_dim = spectral bands,
    # h_dim = hidden width, c_dim = number of classes, B = mini-batch.
    X_dim, h_dim, c_dim = 32, 64, 10

    key = jax.random.PRNGKey(0)
    key, kdata = jax.random.split(key)
    params = init_classifier_params(key, X_dim, h_dim, c_dim)

    # Check a tile-aligned batch (the original mb_size), a ragged one
    # (exercises the pad path), and a larger one (exercises the multi-step
    # "parallel" grid).
    for B in (256, 100, 1000):
        kdata, kx = jax.random.split(kdata)
        # HyperX normalizes data to [0, 1]; mimic that range for the input.
        x = jax.random.uniform(kx, (B, X_dim), dtype=jnp.float32)

        out = jax.block_until_ready(classifier_forward(x, params))
        ref = classifier_reference(x, params)

        assert out.shape == (B, c_dim)
        assert jnp.allclose(out, ref, atol=1e-3, rtol=1e-3), f"mismatch at B={B}"

    print("KERNEL_OK")
</pallas_src>

<mosaic_0001>
module attributes {stable_mosaic.version = 11 : i64} {
  func.func @classifier_kernel(%arg0: i32, %arg1: memref<128x32xf32, #tpu.memory_space<vmem>>, %arg2: memref<64x32xf32, #tpu.memory_space<vmem>>, %arg3: memref<1x64xf32, #tpu.memory_space<vmem>>, %arg4: memref<64x64xf32, #tpu.memory_space<vmem>>, %arg5: memref<1x64xf32, #tpu.memory_space<vmem>>, %arg6: memref<64x64xf32, #tpu.memory_space<vmem>>, %arg7: memref<1x64xf32, #tpu.memory_space<vmem>>, %arg8: memref<10x64xf32, #tpu.memory_space<vmem>>, %arg9: memref<1x10xf32, #tpu.memory_space<vmem>>, %arg10: memref<128x10xf32, #tpu.memory_space<vmem>>) attributes {dimension_semantics = [#tpu.dimension_semantics<parallel>], iteration_bounds = array<i64: 2>, scalar_prefetch = 0 : i64, scratch_operands = 0 : i64, tpu.core_type = #tpu.core_type<tc>, window_params = [{transform_indices = @transform_0, window_bounds = array<i64: 128, 32>}, {pipeline_mode = #tpu.pipeline_mode<synchronous>, transform_indices = @transform_1, window_bounds = array<i64: 64, 32>}, {pipeline_mode = #tpu.pipeline_mode<synchronous>, transform_indices = @transform_2, window_bounds = array<i64: 1, 64>}, {pipeline_mode = #tpu.pipeline_mode<synchronous>, transform_indices = @transform_3, window_bounds = array<i64: 64, 64>}, {pipeline_mode = #tpu.pipeline_mode<synchronous>, transform_indices = @transform_4, window_bounds = array<i64: 1, 64>}, {pipeline_mode = #tpu.pipeline_mode<synchronous>, transform_indices = @transform_5, window_bounds = array<i64: 64, 64>}, {pipeline_mode = #tpu.pipeline_mode<synchronous>, transform_indices = @transform_6, window_bounds = array<i64: 1, 64>}, {pipeline_mode = #tpu.pipeline_mode<synchronous>, transform_indices = @transform_7, window_bounds = array<i64: 10, 64>}, {pipeline_mode = #tpu.pipeline_mode<synchronous>, transform_indices = @transform_8, window_bounds = array<i64: 1, 10>}, {transform_indices = @transform_9, window_bounds = array<i64: 128, 10>}]} {
    %c0 = arith.constant 0 : index
    %c0_0 = arith.constant 0 : index
    %0 = vector.load %arg1[%c0, %c0_0] : memref<128x32xf32, #tpu.memory_space<vmem>>, vector<128x32xf32>
    %c0_1 = arith.constant 0 : index
    %c0_2 = arith.constant 0 : index
    %1 = vector.load %arg2[%c0_1, %c0_2] : memref<64x32xf32, #tpu.memory_space<vmem>>, vector<64x32xf32>
    %cst = arith.constant dense<0.000000e+00> : vector<128x64xf32>
    %2 = tpu.matmul %0, %1, %cst {dimension_numbers = #tpu.dot_dimension_numbers<[1], [1], [0], [0], [0, 0, 1, 0], [], []>} : vector<128x32xf32>, vector<64x32xf32>, vector<128x64xf32> -> vector<128x64xf32>
    %c0_3 = arith.constant 0 : index
    %c0_4 = arith.constant 0 : index
    %3 = vector.load %arg3[%c0_3, %c0_4] : memref<1x64xf32, #tpu.memory_space<vmem>>, vector<1x64xf32>
    %4 = vector.broadcast %3 : vector<1x64xf32> to vector<128x64xf32>
    %5 = arith.addf %2, %4 : vector<128x64xf32>
    %cst_5 = arith.constant 0.000000e+00 : f32
    %6 = vector.broadcast %cst_5 : f32 to vector<128x64xf32>
    %7 = arith.cmpf ogt, %5, %6 : vector<128x64xf32>
    %cst_6 = arith.constant 0.00999999977 : f32
    %8 = vector.broadcast %cst_6 : f32 to vector<128x64xf32>
    %9 = arith.mulf %8, %5 : vector<128x64xf32>
    %10 = arith.select %7, %5, %9 : vector<128x64xi1>, vector<128x64xf32>
    %c0_7 = arith.constant 0 : index
    %c0_8 = arith.constant 0 : index
    %11 = vector.load %arg4[%c0_7, %c0_8] : memref<64x64xf32, #tpu.memory_space<vmem>>, vector<64x64xf32>
    %cst_9 = arith.constant dense<0.000000e+00> : vector<128x64xf32>
    %12 = tpu.matmul %10, %11, %cst_9 {dimension_numbers = #tpu.dot_dimension_numbers<[1], [1], [0], [0], [0, 0, 1, 0], [], []>} : vector<128x64xf32>, vector<64x64xf32>, vector<128x64xf32> -> vector<128x64xf32>
    %c0_10 = arith.constant 0 : index
    %c0_11 = arith.constant 0 : index
    %13 = vector.load %arg5[%c0_10, %c0_11] : memref<1x64xf32, #tpu.memory_space<vmem>>, vector<1x64xf32>
    %14 = vector.broadcast %13 : vector<1x64xf32> to vector<128x64xf32>
    %15 = arith.addf %12, %14 : vector<128x64xf32>
    %cst_12 = arith.constant 0.000000e+00 : f32
    %16 = vector.broadcast %cst_12 : f32 to vector<128x64xf32>
    %17 = arith.cmpf ogt, %15, %16 : vector<128x64xf32>
    %cst_13 = arith.constant 0.00999999977 : f32
    %18 = vector.broadcast %cst_13 : f32 to vector<128x64xf32>
    %19 = arith.mulf %18, %15 : vector<128x64xf32>
    %20 = arith.select %17, %15, %19 : vector<128x64xi1>, vector<128x64xf32>
    %c0_14 = arith.constant 0 : index
    %c0_15 = arith.constant 0 : index
    %21 = vector.load %arg6[%c0_14, %c0_15] : memref<64x64xf32, #tpu.memory_space<vmem>>, vector<64x64xf32>
    %cst_16 = arith.constant dense<0.000000e+00> : vector<128x64xf32>
    %22 = tpu.matmul %20, %21, %cst_16 {dimension_numbers = #tpu.dot_dimension_numbers<[1], [1], [0], [0], [0, 0, 1, 0], [], []>} : vector<128x64xf32>, vector<64x64xf32>, vector<128x64xf32> -> vector<128x64xf32>
    %c0_17 = arith.constant 0 : index
    %c0_18 = arith.constant 0 : index
    %23 = vector.load %arg7[%c0_17, %c0_18] : memref<1x64xf32, #tpu.memory_space<vmem>>, vector<1x64xf32>
    %24 = vector.broadcast %23 : vector<1x64xf32> to vector<128x64xf32>
    %25 = arith.addf %22, %24 : vector<128x64xf32>
    %cst_19 = arith.constant 0.000000e+00 : f32
    %26 = vector.broadcast %cst_19 : f32 to vector<128x64xf32>
    %27 = arith.cmpf ogt, %25, %26 : vector<128x64xf32>
    %cst_20 = arith.constant 0.00999999977 : f32
    %28 = vector.broadcast %cst_20 : f32 to vector<128x64xf32>
    %29 = arith.mulf %28, %25 : vector<128x64xf32>
    %30 = arith.select %27, %25, %29 : vector<128x64xi1>, vector<128x64xf32>
    %c0_21 = arith.constant 0 : index
    %c0_22 = arith.constant 0 : index
    %31 = vector.load %arg8[%c0_21, %c0_22] : memref<10x64xf32, #tpu.memory_space<vmem>>, vector<10x64xf32>
    %cst_23 = arith.constant dense<0.000000e+00> : vector<128x10xf32>
    %32 = tpu.matmul %30, %31, %cst_23 {dimension_numbers = #tpu.dot_dimension_numbers<[1], [1], [0], [0], [0, 0, 1, 0], [], []>} : vector<128x64xf32>, vector<10x64xf32>, vector<128x10xf32> -> vector<128x10xf32>
    %c0_24 = arith.constant 0 : index
    %c0_25 = arith.constant 0 : index
    %33 = vector.load %arg9[%c0_24, %c0_25] : memref<1x10xf32, #tpu.memory_space<vmem>>, vector<1x10xf32>
    %34 = vector.broadcast %33 : vector<1x10xf32> to vector<128x10xf32>
    %35 = arith.addf %32, %34 : vector<128x10xf32>
    %c0_26 = arith.constant 0 : index
    %c0_27 = arith.constant 0 : index
    %36 = vector.load %arg10[%c0_26, %c0_27] : memref<128x10xf32, #tpu.memory_space<vmem>>, vector<128x10xf32>
    tpu.vector_store %arg10[%c0_26, %c0_27], %35 {strides = array<i32>} : memref<128x10xf32, #tpu.memory_space<vmem>>, vector<128x10xf32>,
    return
  }
  func.func @transform_0(%arg0: i32) -> (i32, i32) {
    %c0_i32 = arith.constant 0 : i32
    %c0_i32_0 = arith.constant 0 : i32
    return %arg0, %c0_i32 : i32, i32
  }
  func.func @transform_1(%arg0: i32) -> (i32, i32) {
    %c0_i32 = arith.constant 0 : i32
    %c0_i32_0 = arith.constant 0 : i32
    %c0_i32_1 = arith.constant 0 : i32
    return %c0_i32, %c0_i32_0 : i32, i32
  }
  func.func @transform_2(%arg0: i32) -> (i32, i32) {
    %c0_i32 = arith.constant 0 : i32
    %c0_i32_0 = arith.constant 0 : i32
    %c0_i32_1 = arith.constant 0 : i32
    return %c0_i32, %c0_i32_0 : i32, i32
  }
  func.func @transform_3(%arg0: i32) -> (i32, i32) {
    %c0_i32 = arith.constant 0 : i32
    %c0_i32_0 = arith.constant 0 : i32
    %c0_i32_1 = arith.constant 0 : i32
    return %c0_i32, %c0_i32_0 : i32, i32
  }
  func.func @transform_4(%arg0: i32) -> (i32, i32) {
    %c0_i32 = arith.constant 0 : i32
    %c0_i32_0 = arith.constant 0 : i32
    %c0_i32_1 = arith.constant 0 : i32
    return %c0_i32, %c0_i32_0 : i32, i32
  }
  func.func @transform_5(%arg0: i32) -> (i32, i32) {
    %c0_i32 = arith.constant 0 : i32
    %c0_i32_0 = arith.constant 0 : i32
    %c0_i32_1 = arith.constant 0 : i32
    return %c0_i32, %c0_i32_0 : i32, i32
  }
  func.func @transform_6(%arg0: i32) -> (i32, i32) {
    %c0_i32 = arith.constant 0 : i32
    %c0_i32_0 = arith.constant 0 : i32
    %c0_i32_1 = arith.constant 0 : i32
    return %c0_i32, %c0_i32_0 : i32, i32
  }
  func.func @transform_7(%arg0: i32) -> (i32, i32) {
    %c0_i32 = arith.constant 0 : i32
    %c0_i32_0 = arith.constant 0 : i32
    %c0_i32_1 = arith.constant 0 : i32
    return %c0_i32, %c0_i32_0 : i32, i32
  }
  func.func @transform_8(%arg0: i32) -> (i32, i32) {
    %c0_i32 = arith.constant 0 : i32
    %c0_i32_0 = arith.constant 0 : i32
    %c0_i32_1 = arith.constant 0 : i32
    return %c0_i32, %c0_i32_0 : i32, i32
  }
  func.func @transform_9(%arg0: i32) -> (i32, i32) {
    %c0_i32 = arith.constant 0 : i32
    %c0_i32_0 = arith.constant 0 : i32
    return %arg0, %c0_i32 : i32, i32
  }
}

</mosaic_0001>

<llo_original>
// kernel: classifier_forward.1
$region0: #{classifier_forward.1}
  #allocation0 [shape = 'u32[]', space=smem, size = 0x4, offset = 0x4, fixed_abs, tag = 'smem constant byte address 0x4 - core index']
  #allocation1 [shape = 'u32[72,128]{1,0:T(1,128)}', space=vmem, size = 0x9000, scoped, tag = 'internal scratch']
  %s0 = inlined_call_operand.vmem [shape: f32[256,32], index: 0, kind: input, shape index: {}]
  %s1 = inlined_call_operand.vmem [shape: f32[64,32], index: 1, kind: input, shape index: {}]
  %s2 = inlined_call_operand.vmem [shape: f32[1,64], index: 2, kind: input, shape index: {}]
  %s3 = inlined_call_operand.vmem [shape: f32[64,64], index: 3, kind: input, shape index: {}]
  %s4 = inlined_call_operand.vmem [shape: f32[1,64], index: 4, kind: input, shape index: {}]
  %s5 = inlined_call_operand.vmem [shape: f32[64,64], index: 5, kind: input, shape index: {}]
  %s6 = inlined_call_operand.vmem [shape: f32[1,64], index: 6, kind: input, shape index: {}]
  %s7 = inlined_call_operand.vmem [shape: f32[10,64], index: 7, kind: input, shape index: {}]
  %s8 = inlined_call_operand.vmem [shape: f32[1,10], index: 8, kind: input, shape index: {}]
  %s9 = inlined_call_operand.vmem [shape: f32[256,10], index: 9, kind: output, shape index: {}]
  %s10 = sld [smem:[#allocation0]]
  $region69: #{classifier_forward.1} parent=0
    _
  %s12 = ssub.s32 1, %s10
  %s13 = scalar_select 0, %s12, %s10
  loop: start=0, step=1, limit=4
  $region2: #{classifier_forward.1} parent=0 // loop_pre_header
    _
  $region3: #{classifier_forward.1} parent=0 // loop_header
    %s15 = sphi 0, %s19
    %p16 = scmp.ge.s32.totalorder %s15, 4
    %s25 = sphi 0, %s27
    %s28 = sphi 0, %s25
    %s29 = sphi 0, %s28
    %s45 = sphi 0, %s29
    %s49 = sphi 0, %s49
    %s51 = sphi 0, %s49
    %s52 = sphi 0, %s51
    %s66 = sphi 0, %s52
    %s70 = sphi 0, %s70
    %s72 = sphi 0, %s70
    %s73 = sphi 0, %s72
    %s87 = sphi 0, %s73
    %s91 = sphi 0, %s91
    %s93 = sphi 0, %s91
    %s94 = sphi 0, %s93
    %s108 = sphi 0, %s94
    %s112 = sphi 0, %s112
    %s114 = sphi 0, %s112
    %s115 = sphi 0, %s114
    %s129 = sphi 0, %s115
    %s133 = sphi 0, %s133
    %s135 = sphi 0, %s133
    %s136 = sphi 0, %s135
    %s150 = sphi 0, %s136
    %s154 = sphi 0, %s154
    %s156 = sphi 0, %s154
    %s157 = sphi 0, %s156
    %s171 = sphi 0, %s157
    %s175 = sphi 0, %s175
    %s177 = sphi 0, %s175
    %s178 = sphi 0, %s177
    %s192 = sphi 0, %s178
    %s196 = sphi 0, %s196
    %s198 = sphi 0, %s196
    %s199 = sphi 0, %s198
    %s213 = sphi 0, %s199
    %s219 = sphi 0, %s221
    %s222 = sphi 0, %s219
    %s223 = sphi 0, %s222
    %s239 = sphi 0, %s223
  $region4: #{classifier_forward.1} parent=0 // loop_header_branch
    %18 = sbr.rel (%p16) target = $region8
  $region5: #{classifier_forward.1} parent=0 // loop_body
    %s20 = ssub.s32 %s15, 1
    %s21 = ssub.s32 %s15, 2
    %s22 = sadd.s32 %s15, 1
    %s23 = ssub.s32 %s15, %s22
    %p24 = scmp.eq.s32.totalorder %s23, 0
    %s26 = sadd.s32 %s25, 1
    %s27 = scalar_select %p24, %s25, %s26
    %p30 = pneg %p24
    %p31 = scmp.eq.s32.totalorder %s15, 1
    %p32 = por %p30, %p31
    %p33 = scmp.ne.s32.totalorder %s25, %s28
    %p34 = scmp.eq.s32.totalorder %s15, 0
    %p35 = por %p33, %p34
    %p36 = scmp.ne.s32.totalorder %s25, %s28
    %p37 = scmp.eq.s32.totalorder %s20, 1
    %p38 = por %p36, %p37
    %p39 = scmp.ne.s32.totalorder %s28, %s29
    %p40 = scmp.eq.s32.totalorder %s20, 0
    %p41 = por %p39, %p40
    %p42 = scmp.ne.s32.totalorder %s28, %s29
    %p43 = scmp.eq.s32.totalorder %s21, 1
    %p44 = por %p42, %p43
    %p46 = scmp.ne.s32.totalorder %s29, %s45
    %p47 = scmp.eq.s32.totalorder %s21, 0
    %p48 = por %p46, %p47
    %s50 = sadd.s32 %s49, 1
    %p53 = scmp.eq.s32.totalorder %s15, 1
    %p54 = scmp.ne.s32.totalorder %s49, %s51
    %p55 = scmp.eq.s32.totalorder %s15, 0
    %p56 = por %p54, %p55
    %p57 = scmp.ne.s32.totalorder %s49, %s51
    %p58 = scmp.eq.s32.totalorder %s20, 1
    %p59 = por %p57, %p58
    %p60 = scmp.ne.s32.totalorder %s51, %s52
    %p61 = scmp.eq.s32.totalorder %s20, 0
    %p62 = por %p60, %p61
    %p63 = scmp.ne.s32.totalorder %s51, %s52
    %p64 = scmp.eq.s32.totalorder %s21, 1
    %p65 = por %p63, %p64
    %p67 = scmp.ne.s32.totalorder %s52, %s66
    %p68 = scmp.eq.s32.totalorder %s21, 0
    %p69 = por %p67, %p68
    %s71 = sadd.s32 %s70, 1
    %p74 = scmp.eq.s32.totalorder %s15, 1
    %p75 = scmp.ne.s32.totalorder %s70, %s72
    %p76 = scmp.eq.s32.totalorder %s15, 0
    %p77 = por %p75, %p76
    %p78 = scmp.ne.s32.totalorder %s70, %s72
    %p79 = scmp.eq.s32.totalorder %s20, 1
    %p80 = por %p78, %p79
    %p81 = scmp.ne.s32.totalorder %s72, %s73
    %p82 = scmp.eq.s32.totalorder %s20, 0
    %p83 = por %p81, %p82
    %p84 = scmp.ne.s32.totalorder %s72, %s73
    %p85 = scmp.eq.s32.totalorder %s21, 1
    %p86 = por %p84, %p85
    %p88 = scmp.ne.s32.totalorder %s73, %s87
    %p89 = scmp.eq.s32.totalorder %s21, 0
    %p90 = por %p88, %p89
    %s92 = sadd.s32 %s91, 1
    %p95 = scmp.eq.s32.totalorder %s15, 1
    %p96 = scmp.ne.s32.totalorder %s91, %s93
    %p97 = scmp.eq.s32.totalorder %s15, 0
    %p98 = por %p96, %p97
    %p99 = scmp.ne.s32.totalorder %s91, %s93
    %p100 = scmp.eq.s32.totalorder %s20, 1
    %p101 = por %p99, %p100
    %p102 = scmp.ne.s32.totalorder %s93, %s94
    %p103 = scmp.eq.s32.totalorder %s20, 0
    %p104 = por %p102, %p103
    %p105 = scmp.ne.s32.totalorder %s93, %s94
    %p106 = scmp.eq.s32.totalorder %s21, 1
    %p107 = por %p105, %p106
    %p109 = scmp.ne.s32.totalorder %s94, %s108
    %p110 = scmp.eq.s32.totalorder %s21, 0
    %p111 = por %p109, %p110
    %s113 = sadd.s32 %s112, 1
    %p116 = scmp.eq.s32.totalorder %s15, 1
    %p117 = scmp.ne.s32.totalorder %s112, %s114
    %p118 = scmp.eq.s32.totalorder %s15, 0
    %p119 = por %p117, %p118
    %p120 = scmp.ne.s32.totalorder %s112, %s114
    %p121 = scmp.eq.s32.totalorder %s20, 1
    %p122 = por %p120, %p121
    %p123 = scmp.ne.s32.totalorder %s114, %s115
    %p124 = scmp.eq.s32.totalorder %s20, 0
    %p125 = por %p123, %p124
    %p126 = scmp.ne.s32.totalorder %s114, %s115
    %p127 = scmp.eq.s32.totalorder %s21, 1
    %p128 = por %p126, %p127
    %p130 = scmp.ne.s32.totalorder %s115, %s129
    %p131 = scmp.eq.s32.totalorder %s21, 0
    %p132 = por %p130, %p131
    %s134 = sadd.s32 %s133, 1
    %p137 = scmp.eq.s32.totalorder %s15, 1
    %p138 = scmp.ne.s32.totalorder %s133, %s135
    %p139 = scmp.eq.s32.totalorder %s15, 0
    %p140 = por %p138, %p139
    %p141 = scmp.ne.s32.totalorder %s133, %s135
    %p142 = scmp.eq.s32.totalorder %s20, 1
    %p143 = por %p141, %p142
    %p144 = scmp.ne.s32.totalorder %s135, %s136
    %p145 = scmp.eq.s32.totalorder %s20, 0
    %p146 = por %p144, %p145
    %p147 = scmp.ne.s32.totalorder %s135, %s136
    %p148 = scmp.eq.s32.totalorder %s21, 1
    %p149 = por %p147, %p148
    %p151 = scmp.ne.s32.totalorder %s136, %s150
    %p152 = scmp.eq.s32.totalorder %s21, 0
    %p153 = por %p151, %p152
    %s155 = sadd.s32 %s154, 1
    %p158 = scmp.eq.s32.totalorder %s15, 1
    %p159 = scmp.ne.s32.totalorder %s154, %s156
    %p160 = scmp.eq.s32.totalorder %s15, 0
    %p161 = por %p159, %p160
    %p162 = scmp.ne.s32.totalorder %s154, %s156
    %p163 = scmp.eq.s32.totalorder %s20, 1
    %p164 = por %p162, %p163
    %p165 = scmp.ne.s32.totalorder %s156, %s157
    %p166 = scmp.eq.s32.totalorder %s20, 0
    %p167 = por %p165, %p166
    %p168 = scmp.ne.s32.totalorder %s156, %s157
    %p169 = scmp.eq.s32.totalorder %s21, 1
    %p170 = por %p168, %p169
    %p172 = scmp.ne.s32.totalorder %s157, %s171
    %p173 = scmp.eq.s32.totalorder %s21, 0
    %p174 = por %p172, %p173
    %s176 = sadd.s32 %s175, 1
    %p179 = scmp.eq.s32.totalorder %s15, 1
    %p180 = scmp.ne.s32.totalorder %s175, %s177
    %p181 = scmp.eq.s32.totalorder %s15, 0
    %p182 = por %p180, %p181
    %p183 = scmp.ne.s32.totalorder %s175, %s177
    %p184 = scmp.eq.s32.totalorder %s20, 1
    %p185 = por %p183, %p184
    %p186 = scmp.ne.s32.totalorder %s177, %s178
    %p187 = scmp.eq.s32.totalorder %s20, 0
    %p188 = por %p186, %p187
    %p189 = scmp.ne.s32.totalorder %s177, %s178
    %p190 = scmp.eq.s32.totalorder %s21, 1
    %p191 = por %p189, %p190
    %p193 = scmp.ne.s32.totalorder %s178, %s192
    %p194 = scmp.eq.s32.totalorder %s21, 0
    %p195 = por %p193, %p194
    %s197 = sadd.s32 %s196, 1
    %p200 = scmp.eq.s32.totalorder %s15, 1
    %p201 = scmp.ne.s32.totalorder %s196, %s198
    %p202 = scmp.eq.s32.totalorder %s15, 0
    %p203 = por %p201, %p202
    %p204 = scmp.ne.s32.totalorder %s196, %s198
    %p205 = scmp.eq.s32.totalorder %s20, 1
    %p206 = por %p204, %p205
    %p207 = scmp.ne.s32.totalorder %s198, %s199
    %p208 = scmp.eq.s32.totalorder %s20, 0
    %p209 = por %p207, %p208
    %p210 = scmp.ne.s32.totalorder %s198, %s199
    %p211 = scmp.eq.s32.totalorder %s21, 1
    %p212 = por %p210, %p211
    %p214 = scmp.ne.s32.totalorder %s199, %s213
    %p215 = scmp.eq.s32.totalorder %s21, 0
    %p216 = por %p214, %p215
    %s217 = ssub.s32 %s15, %s22
    %p218 = scmp.eq.s32.totalorder %s217, 0
    %s220 = sadd.s32 %s219, 1
    %s221 = scalar_select %p218, %s219, %s220
    %p224 = pneg %p218
    %p225 = scmp.eq.s32.totalorder %s15, 1
    %p226 = por %p224, %p225
    %p227 = scmp.ne.s32.totalorder %s219, %s222
    %p228 = scmp.eq.s32.totalorder %s15, 0
    %p229 = por %p227, %p228
    %p230 = scmp.ne.s32.totalorder %s219, %s222
    %p231 = scmp.eq.s32.totalorder %s20, 1
    %p232 = por %p230, %p231
    %p233 = scmp.ne.s32.totalorder %s222, %s223
    %p234 = scmp.eq.s32.totalorder %s20, 0
    %p235 = por %p233, %p234
    %p236 = scmp.ne.s32.totalorder %s222, %s223
    %p237 = scmp.eq.s32.totalorder %s21, 1
    %p238 = por %p236, %p237
    %p240 = scmp.ne.s32.totalorder %s223, %s239
    %p241 = scmp.eq.s32.totalorder %s21, 0
    %p242 = por %p240, %p241
    %p243 = scmp.le.s32.totalorder 1, %s15
    %p244 = scmp.lt.s32.totalorder %s15, 3
    %p245 = pnand %p243, %p244
    %p246 = pneg %p245
    // Predicated region
    $region9: #{classifier_forward.1} parent=5 // pred_check
      _
    $region10: #{classifier_forward.1} parent=5 // pred_check_branch
      %248 = sbr.rel (%p245) target = $region12
    $region11: #{classifier_forward.1} parent=5 // pred_region
      %s249 = ssub.s32 %s15, 1
      // Predicated region
      $region13: #{classifier_forward.1} parent=11 // pred_check
        %p250 = pneg %p62
      $region14: #{classifier_forward.1} parent=11 // pred_check_branch
        %252 = sbr.rel (%p250) target = $region16
      $region15: #{classifier_forward.1} parent=11 // pred_region
        _
      $region16: #{classifier_forward.1} parent=11 // pred_fallthru
        _
      // Predicated region
      $region17: #{classifier_forward.1} parent=11 // pred_check
        %p253 = pneg %p83
      $region18: #{classifier_forward.1} parent=11 // pred_check_branch
        %255 = sbr.rel (%p253) target = $region20
      $region19: #{classifier_forward.1} parent=11 // pred_region
        _
      $region20: #{classifier_forward.1} parent=11 // pred_fallthru
        _
      // Predicated region
      $region21: #{classifier_forward.1} parent=11 // pred_check
        %p256 = pneg %p104
      $region22: #{classifier_forward.1} parent=11 // pred_check_branch
        %258 = sbr.rel (%p256) target = $region24
      $region23: #{classifier_forward.1} parent=11 // pred_region
        _
      $region24: #{classifier_forward.1} parent=11 // pred_fallthru
        _
      // Predicated region
      $region25: #{classifier_forward.1} parent=11 // pred_check
        %p259 = pneg %p125
      $region26: #{classifier_forward.1} parent=11 // pred_check_branch
        %261 = sbr.rel (%p259) target = $region28
      $region27: #{classifier_forward.1} parent=11 // pred_region
        _
      $region28: #{classifier_forward.1} parent=11 // pred_fallthru
        _
      // Predicated region
      $region29: #{classifier_forward.1} parent=11 // pred_check
        %p262 = pneg %p146
      $region30: #{classifier_forward.1} parent=11 // pred_check_branch
        %264 = sbr.rel (%p262) target = $region32
      $region31: #{classifier_forward.1} parent=11 // pred_region
        _
      $region32: #{classifier_forward.1} parent=11 // pred_fallthru
        _
      // Predicated region
      $region33: #{classifier_forward.1} parent=11 // pred_check
        %p265 = pneg %p167
      $region34: #{classifier_forward.1} parent=11 // pred_check_branch
        %267 = sbr.rel (%p265) target = $region36
      $region35: #{classifier_forward.1} parent=11 // pred_region
        _
      $region36: #{classifier_forward.1} parent=11 // pred_fallthru
        _
      // Predicated region
      $region37: #{classifier_forward.1} parent=11 // pred_check
        %p268 = pneg %p188
      $region38: #{classifier_forward.1} parent=11 // pred_check_branch
        %270 = sbr.rel (%p268) target = $region40
      $region39: #{classifier_forward.1} parent=11 // pred_region
        _
      $region40: #{classifier_forward.1} parent=11 // pred_fallthru
        _
      // Predicated region
      $region41: #{classifier_forward.1} parent=11 // pred_check
        %p271 = pneg %p209
      $region42: #{classifier_forward.1} parent=11 // pred_check_branch
        %273 = sbr.rel (%p271) target = $region44
      $region43: #{classifier_forward.1} parent=11 // pred_region
        _
      $region44: #{classifier_forward.1} parent=11 // pred_fallthru
        _
    $region12: #{classifier_forward.1} parent=5 // pred_fallthru
      _
    %p274 = scmp.lt.s32.totalorder %s15, 2
    // Predicated region
    $region45: #{classifier_forward.1} parent=5 // pred_check
      %p275 = pneg %p274
    $region46: #{classifier_forward.1} parent=5 // pred_check_branch
      %277 = sbr.rel (%p275) target = $region48
    $region47: #{classifier_forward.1} parent=5 // pred_region
      // Predicated region
      $region49: #{classifier_forward.1} parent=47 // pred_check
        %p278 = pneg %p35
      $region50: #{classifier_forward.1} parent=47 // pred_check_branch
        %280 = sbr.rel (%p278) target = $region52
      $region51: #{classifier_forward.1} parent=47 // pred_region
        %s281 = smul.u32 16, %s15
        %p282 = scmp.lt.s32.totalorder %s281, 31
        %s283 = scalar_select %p282, %s281, 31
        %s284 = smul.addr %s283, 8
        %s285 = scalar_lea.vmem %s0, %s284
        %s286 = smul.u32 16, %s15
      $region52: #{classifier_forward.1} parent=47 // pred_fallthru
        _
    $region48: #{classifier_forward.1} parent=5 // pred_fallthru
      _
    %p287 = scmp.le.s32.totalorder 1, %s15
    %p288 = scmp.lt.s32.totalorder %s15, 3
    %p289 = pnand %p287, %p288
    %p290 = pneg %p289
    // Predicated region
    $region53: #{classifier_forward.1} parent=5 // pred_check
      _
    $region54: #{classifier_forward.1} parent=5 // pred_check_branch
      %292 = sbr.rel (%p289) target = $region56
    $region55: #{classifier_forward.1} parent=5 // pred_region
      %s293 = ssub.s32 %s15, 1
      %s294 = smul.u32 16, %s20
      %p295 = scmp.lt.s32.totalorder %s294, 31
      %s296 = scalar_select %p295, %s294, 31
      %s297 = smul.addr %s296, 8
      %s298 = scalar_lea.vmem %s0, %s297
      %p299 = pneg %p41
      %p300 = pneg %p38
      %p301 = pneg %p62
      %p302 = pneg %p59
      %p303 = pneg %p83
      %p304 = pneg %p80
      %p305 = pneg %p104
      %p306 = pneg %p101
      %p307 = pneg %p125
      %p308 = pneg %p122
      %p309 = pneg %p146
      %p310 = pneg %p143
      %p311 = pneg %p167
      %p312 = pneg %p164
      %p313 = pneg %p188
      %p314 = pneg %p185
      %p315 = pneg %p209
      %p316 = pneg %p206
      %p317 = pneg %p235
      %p318 = pneg %p232
      %s319 = smul.u32 16, %s20
      %p320 = scmp.lt.s32.totalorder %s319, 31
      %s321 = scalar_select %p320, %s319, 31
      %s322 = smul.addr %s321, 8
      %s323 = scalar_lea.vmem %s9, %s322
      %s324 = smul.u32 16, %s20
      %p325 = scmp.lt.s32.totalorder %s324, 31
      %s326 = scalar_select %p325, %s324, 31
      %s327 = smul.addr %s326, 8
      %s328 = scalar_lea.vmem %s0, %s327
      %s329 = smul.u32 16, %s20
      %s330 = smul.u32 16, %s20
      %p331 = scmp.lt.s32.totalorder %s330, 31
      %s332 = scalar_select %p331, %s330, 31
      %s333 = smul.addr %s332, 8
      %s334 = scalar_lea.vmem %s9, %s333
      %s335 = smul.u32 16, %s20
      %v336 = vld [vmem:[%s328] sm:$0xff]
      %v337 = vld [vmem:[%s328 + $0x8] sm:$0xff]
      %v338 = vld [vmem:[%s328 + $0x10] sm:$0xff]
      %v339 = vld [vmem:[%s328 + $0x18] sm:$0xff]
      %v340 = vld [vmem:[%s328 + $0x20] sm:$0xff]
      %v341 = vld [vmem:[%s328 + $0x28] sm:$0xff]
      %v342 = vld [vmem:[%s328 + $0x30] sm:$0xff]
      %v343 = vld [vmem:[%s328 + $0x38] sm:$0xff]
      %v344 = vld [vmem:[%s328 + $0x40] sm:$0xff]
      %v345 = vld [vmem:[%s328 + $0x48] sm:$0xff]
      %v346 = vld [vmem:[%s328 + $0x50] sm:$0xff]
      %v347 = vld [vmem:[%s328 + $0x58] sm:$0xff]
      %v348 = vld [vmem:[%s328 + $0x60] sm:$0xff]
      %v349 = vld [vmem:[%s328 + $0x68] sm:$0xff]
      %v350 = vld [vmem:[%s328 + $0x70] sm:$0xff]
      %v351 = vld [vmem:[%s328 + $0x78] sm:$0xff]
      %v352 = vld [vmem:[%s1] sm:$0xff]
      %v353 = vld [vmem:[%s1 + $0x8] sm:$0xff]
      %v354 = vld [vmem:[%s1 + $0x10] sm:$0xff]
      %v355 = vld [vmem:[%s1 + $0x18] sm:$0xff]
      %v356 = vld [vmem:[%s1 + $0x20] sm:$0xff]
      %v357 = vld [vmem:[%s1 + $0x28] sm:$0xff]
      %v358 = vld [vmem:[%s1 + $0x30] sm:$0xff]
      %v359 = vld [vmem:[%s1 + $0x38] sm:$0xff]
      %v360 = vld [vmem:[%s2] sm:$0x1]
      %v362 = vperm.slane %v360, 0
      %vm364 = vcmask 261120
      %v366 = vsel %vm364, %v336, 0
      %v369 = vsel %vm364, %v337, 0
      %v372 = vsel %vm364, %v338, 0
      %v375 = vsel %vm364, %v339, 0
      %v378 = vsel %vm364, %v340, 0
      %v381 = vsel %vm364, %v341, 0
      %v384 = vsel %vm364, %v342, 0
      %v387 = vsel %vm364, %v343, 0
      %v390 = vsel %vm364, %v344, 0
      %v393 = vsel %vm364, %v345, 0
      %v396 = vsel %vm364, %v346, 0
      %v399 = vsel %vm364, %v347, 0
      %v402 = vsel %vm364, %v348, 0
      %v405 = vsel %vm364, %v349, 0
      %v408 = vsel %vm364, %v350, 0
      %v411 = vsel %vm364, %v351, 0
      %v414 = vsel %vm364, %v352, 0
      %v417 = vsel %vm364, %v353, 0
      %v420 = vsel %vm364, %v354, 0
      %v423 = vsel %vm364, %v355, 0
      %v426 = vsel %vm364, %v356, 0
      %v429 = vsel %vm364, %v357, 0
      %v432 = vsel %vm364, %v358, 0
      %v435 = vsel %vm364, %v359, 0
      %437 = vmatpush.xpose.msra.mxu0 0.0
      %438 = vmatpush.xpose.msra.mxu0 0.0
      %439 = vmatpush.xpose.msra.mxu0 0.0
      %440 = vmatpush.xpose.msra.mxu0 0.0
      %441 = vmatpush.xpose.msra.mxu0 0.0
      %442 = vmatpush.xpose.msra.mxu0 0.0
      %443 = vmatpush.xpose.msra.mxu0 0.0
      %444 = vmatpush.xpose.msra.mxu0 0.0
      %445 = vmatpush.xpose.msra.mxu0 %v435
      %446 = vmatpush.xpose.msra.mxu0 %v432
      %447 = vmatpush.xpose.msra.mxu0 %v429
      %448 = vmatpush.xpose.msra.mxu0 %v426
      %449 = vmatpush.xpose.msra.mxu0 %v423
      %450 = vmatpush.xpose.msra.mxu0 %v420
      %451 = vmatpush.xpose.msra.mxu0 %v417
      %452 = vmatpush.xpose.msra.mxu0 %v414
      %453 = vmatmul.f32.gmra.mxu0 %v366
      %v454 = vpop.f32.mrf.mxu0
      %v455 = vadd.f32 %v362, %v454
      %456 = vmatmul.f32.gmra.mxu0 %v369
      %v457 = vpop.f32.mrf.mxu0
      %v458 = vadd.f32 %v362, %v457
      %459 = vmatmul.f32.gmra.mxu0 %v372
      %v460 = vpop.f32.mrf.mxu0
      %v461 = vadd.f32 %v362, %v460
      %462 = vmatmul.f32.gmra.mxu0 %v375
      %v463 = vpop.f32.mrf.mxu0
      %v464 = vadd.f32 %v362, %v463
      %465 = vmatmul.f32.gmra.mxu0 %v378
      %v466 = vpop.f32.mrf.mxu0
      %v467 = vadd.f32 %v362, %v466
      %468 = vmatmul.f32.gmra.mxu0 %v381
      %v469 = vpop.f32.mrf.mxu0
      %v470 = vadd.f32 %v362, %v469
      %471 = vmatmul.f32.gmra.mxu0 %v384
      %v472 = vpop.f32.mrf.mxu0
      %v473 = vadd.f32 %v362, %v472
      %474 = vmatmul.f32.gmra.mxu0 %v387
      %v475 = vpop.f32.mrf.mxu0
      %v476 = vadd.f32 %v362, %v475
      %477 = vmatmul.f32.gmra.mxu0 %v390
      %v478 = vpop.f32.mrf.mxu0
      %v479 = vadd.f32 %v362, %v478
      %480 = vmatmul.f32.gmra.mxu0 %v393
      %v481 = vpop.f32.mrf.mxu0
      %v482 = vadd.f32 %v362, %v481
      %483 = vmatmul.f32.gmra.mxu0 %v396
      %v484 = vpop.f32.mrf.mxu0
      %v485 = vadd.f32 %v362, %v484
      %486 = vmatmul.f32.gmra.mxu0 %v399
      %v487 = vpop.f32.mrf.mxu0
      %v488 = vadd.f32 %v362, %v487
      %489 = vmatmul.f32.gmra.mxu0 %v402
      %v490 = vpop.f32.mrf.mxu0
      %v491 = vadd.f32 %v362, %v490
      %492 = vmatmul.f32.gmra.mxu0 %v405
      %v493 = vpop.f32.mrf.mxu0
      %v494 = vadd.f32 %v362, %v493
      %495 = vmatmul.f32.gmra.mxu0 %v408
      %v496 = vpop.f32.mrf.mxu0
      %v497 = vadd.f32 %v362, %v496
      %498 = vmatmul.f32.gmra.mxu0 %v411
      %v499 = vpop.f32.mrf.mxu0
      %v500 = vadd.f32 %v362, %v499
      %501 = vdwg.mxu0
      %vm502 = vcmp.gt.f32.partialorder %v455, 0.0
      %vm503 = vcmp.gt.f32.partialorder %v458, 0.0
      %vm504 = vcmp.gt.f32.partialorder %v461, 0.0
      %vm505 = vcmp.gt.f32.partialorder %v464, 0.0
      %vm506 = vcmp.gt.f32.partialorder %v467, 0.0
      %vm507 = vcmp.gt.f32.partialorder %v470, 0.0
      %vm508 = vcmp.gt.f32.partialorder %v473, 0.0
      %vm509 = vcmp.gt.f32.partialorder %v476, 0.0
      %vm510 = vcmp.gt.f32.partialorder %v479, 0.0
      %vm511 = vcmp.gt.f32.partialorder %v482, 0.0
      %vm512 = vcmp.gt.f32.partialorder %v485, 0.0
      %vm513 = vcmp.gt.f32.partialorder %v488, 0.0
      %vm514 = vcmp.gt.f32.partialorder %v491, 0.0
      %vm515 = vcmp.gt.f32.partialorder %v494, 0.0
      %vm516 = vcmp.gt.f32.partialorder %v497, 0.0
      %vm517 = vcmp.gt.f32.partialorder %v500, 0.0
      %v518 = vmul.f32 %v455, 0.01
      %v519 = vmul.f32 %v458, 0.01
      %v520 = vmul.f32 %v461, 0.01
      %v521 = vmul.f32 %v464, 0.01
      %v522 = vmul.f32 %v467, 0.01
      %v523 = vmul.f32 %v470, 0.01
      %v524 = vmul.f32 %v473, 0.01
      %v525 = vmul.f32 %v476, 0.01
      %v526 = vmul.f32 %v479, 0.01
      %v527 = vmul.f32 %v482, 0.01
      %v528 = vmul.f32 %v485, 0.01
      %v529 = vmul.f32 %v488, 0.01
      %v530 = vmul.f32 %v491, 0.01
      %v531 = vmul.f32 %v494, 0.01
      %v532 = vmul.f32 %v497, 0.01
      %v533 = vmul.f32 %v500, 0.01
      %v534 = vsel %vm502, %v455, %v518
      %v535 = vsel %vm503, %v458, %v519
      %v536 = vsel %vm504, %v461, %v520
      %v537 = vsel %vm505, %v464, %v521
      %v538 = vsel %vm506, %v467, %v522
      %v539 = vsel %vm507, %v470, %v523
      %v540 = vsel %vm508, %v473, %v524
      %v541 = vsel %vm509, %v476, %v525
      %v542 = vsel %vm510, %v479, %v526
      %v543 = vsel %vm511, %v482, %v527
      %v544 = vsel %vm512, %v485, %v528
      %v545 = vsel %vm513, %v488, %v529
      %v546 = vsel %vm514, %v491, %v530
      %v547 = vsel %vm515, %v494, %v531
      %v548 = vsel %vm516, %v497, %v532
      %v549 = vsel %vm517, %v500, %v533
      %v550 = vld [vmem:[%s3] sm:$0xff]
      %v551 = vld [vmem:[%s3 + $0x8] sm:$0xff]
      %v552 = vld [vmem:[%s3 + $0x10] sm:$0xff]
      %v553 = vld [vmem:[%s3 + $0x18] sm:$0xff]
      %v554 = vld [vmem:[%s3 + $0x20] sm:$0xff]
      %v555 = vld [vmem:[%s3 + $0x28] sm:$0xff]
      %v556 = vld [vmem:[%s3 + $0x30] sm:$0xff]
      %v557 = vld [vmem:[%s3 + $0x38] sm:$0xff]
      %v558 = vld [vmem:[%s4] sm:$0x1]
      %v560 = vperm.slane %v558, 0
      %vm562 = vcmask 523264
      %v564 = vsel %vm562, %v534, 0
      %v567 = vsel %vm562, %v535, 0
      %v570 = vsel %vm562, %v536, 0
      %v573 = vsel %vm562, %v537, 0
      %v576 = vsel %vm562, %v538, 0
      %v579 = vsel %vm562, %v539, 0
      %v582 = vsel %vm562, %v540, 0
      %v585 = vsel %vm562, %v541, 0
      %v588 = vsel %vm562, %v542, 0
      %v591 = vsel %vm562, %v543, 0
      %v594 = vsel %vm562, %v544, 0
      %v597 = vsel %vm562, %v545, 0
      %v600 = vsel %vm562, %v546, 0
      %v603 = vsel %vm562, %v547, 0
      %v606 = vsel %vm562, %v548, 0
      %v609 = vsel %vm562, %v549, 0
      %v612 = vsel %vm562, %v550, 0
      %v615 = vsel %vm562, %v551, 0
      %v618 = vsel %vm562, %v552, 0
      %v621 = vsel %vm562, %v553, 0
      %v624 = vsel %vm562, %v554, 0
      %v627 = vsel %vm562, %v555, 0
      %v630 = vsel %vm562, %v556, 0
      %v633 = vsel %vm562, %v557, 0
      %635 = vmatpush.xpose.msra.mxu0 0.0
      %636 = vmatpush.xpose.msra.mxu0 0.0
      %637 = vmatpush.xpose.msra.mxu0 0.0
      %638 = vmatpush.xpose.msra.mxu0 0.0
      %639 = vmatpush.xpose.msra.mxu0 0.0
      %640 = vmatpush.xpose.msra.mxu0 0.0
      %641 = vmatpush.xpose.msra.mxu0 0.0
      %642 = vmatpush.xpose.msra.mxu0 0.0
      %643 = vmatpush.xpose.msra.mxu0 %v633
      %644 = vmatpush.xpose.msra.mxu0 %v630
      %645 = vmatpush.xpose.msra.mxu0 %v627
      %646 = vmatpush.xpose.msra.mxu0 %v624
      %647 = vmatpush.xpose.msra.mxu0 %v621
      %648 = vmatpush.xpose.msra.mxu0 %v618
      %649 = vmatpush.xpose.msra.mxu0 %v615
      %650 = vmatpush.xpose.msra.mxu0 %v612
      %651 = vmatmul.f32.gmra.mxu0 %v564
      %v652 = vpop.f32.mrf.mxu0
      %v653 = vadd.f32 %v560, %v652
      %654 = vmatmul.f32.gmra.mxu0 %v567
      %v655 = vpop.f32.mrf.mxu0
      %v656 = vadd.f32 %v560, %v655
      %657 = vmatmul.f32.gmra.mxu0 %v570
      %v658 = vpop.f32.mrf.mxu0
      %v659 = vadd.f32 %v560, %v658
      %660 = vmatmul.f32.gmra.mxu0 %v573
      %v661 = vpop.f32.mrf.mxu0
      %v662 = vadd.f32 %v560, %v661
      %663 = vmatmul.f32.gmra.mxu0 %v576
      %v664 = vpop.f32.mrf.mxu0
      %v665 = vadd.f32 %v560, %v664
      %666 = vmatmul.f32.gmra.mxu0 %v579
      %v667 = vpop.f32.mrf.mxu0
      %v668 = vadd.f32 %v560, %v667
      %669 = vmatmul.f32.gmra.mxu0 %v582
      %v670 = vpop.f32.mrf.mxu0
      %v671 = vadd.f32 %v560, %v670
      %672 = vmatmul.f32.gmra.mxu0 %v585
      %v673 = vpop.f32.mrf.mxu0
      %v674 = vadd.f32 %v560, %v673
      %675 = vmatmul.f32.gmra.mxu0 %v588
      %v676 = vpop.f32.mrf.mxu0
      %v677 = vadd.f32 %v560, %v676
      %678 = vmatmul.f32.gmra.mxu0 %v591
      %v679 = vpop.f32.mrf.mxu0
      %v680 = vadd.f32 %v560, %v679
      %681 = vmatmul.f32.gmra.mxu0 %v594
      %v682 = vpop.f32.mrf.mxu0
      %v683 = vadd.f32 %v560, %v682
      %684 = vmatmul.f32.gmra.mxu0 %v597
      %v685 = vpop.f32.mrf.mxu0
      %v686 = vadd.f32 %v560, %v685
      %687 = vmatmul.f32.gmra.mxu0 %v600
      %v688 = vpop.f32.mrf.mxu0
      %v689 = vadd.f32 %v560, %v688
      %690 = vmatmul.f32.gmra.mxu0 %v603
      %v691 = vpop.f32.mrf.mxu0
      %v692 = vadd.f32 %v560, %v691
      %693 = vmatmul.f32.gmra.mxu0 %v606
      %v694 = vpop.f32.mrf.mxu0
      %v695 = vadd.f32 %v560, %v694
      %696 = vmatmul.f32.gmra.mxu0 %v609
      %v697 = vpop.f32.mrf.mxu0
      %v698 = vadd.f32 %v560, %v697
      %699 = vdwg.mxu0
      %vm700 = vcmp.gt.f32.partialorder %v653, 0.0
      %vm701 = vcmp.gt.f32.partialorder %v656, 0.0
      %vm702 = vcmp.gt.f32.partialorder %v659, 0.0
      %vm703 = vcmp.gt.f32.partialorder %v662, 0.0
      %vm704 = vcmp.gt.f32.partialorder %v665, 0.0
      %vm705 = vcmp.gt.f32.partialorder %v668, 0.0
      %vm706 = vcmp.gt.f32.partialorder %v671, 0.0
      %vm707 = vcmp.gt.f32.partialorder %v674, 0.0
      %vm708 = vcmp.gt.f32.partialorder %v677, 0.0
      %vm709 = vcmp.gt.f32.partialorder %v680, 0.0
      %vm710 = vcmp.gt.f32.partialorder %v683, 0.0
      %vm711 = vcmp.gt.f32.partialorder %v686, 0.0
      %vm712 = vcmp.gt.f32.partialorder %v689, 0.0
      %vm713 = vcmp.gt.f32.partialorder %v692, 0.0
      %vm714 = vcmp.gt.f32.partialorder %v695, 0.0
      %vm715 = vcmp.gt.f32.partialorder %v698, 0.0
      %v716 = vmul.f32 %v653, 0.01
      %v717 = vmul.f32 %v656, 0.01
      %v718 = vmul.f32 %v659, 0.01
      %v719 = vmul.f32 %v662, 0.01
      %v720 = vmul.f32 %v665, 0.01
      %v721 = vmul.f32 %v668, 0.01
      %v722 = vmul.f32 %v671, 0.01
      %v723 = vmul.f32 %v674, 0.01
      %v724 = vmul.f32 %v677, 0.01
      %v725 = vmul.f32 %v680, 0.01
      %v726 = vmul.f32 %v683, 0.01
      %v727 = vmul.f32 %v686, 0.01
      %v728 = vmul.f32 %v689, 0.01
      %v729 = vmul.f32 %v692, 0.01
      %v730 = vmul.f32 %v695, 0.01
      %v731 = vmul.f32 %v698, 0.01
      %v732 = vsel %vm700, %v653, %v716
      %v733 = vsel %vm701, %v656, %v717
      %v734 = vsel %vm702, %v659, %v718
      %v735 = vsel %vm703, %v662, %v719
      %v736 = vsel %vm704, %v665, %v720
      %v737 = vsel %vm705, %v668, %v721
      %v738 = vsel %vm706, %v671, %v722
      %v739 = vsel %vm707, %v674, %v723
      %v740 = vsel %vm708, %v677, %v724
      %v741 = vsel %vm709, %v680, %v725
      %v742 = vsel %vm710, %v683, %v726
      %v743 = vsel %vm711, %v686, %v727
      %v744 = vsel %vm712, %v689, %v728
      %v745 = vsel %vm713, %v692, %v729
      %v746 = vsel %vm714, %v695, %v730
      %v747 = vsel %vm715, %v698, %v731
      %v748 = vld [vmem:[%s5] sm:$0xff]
      %v749 = vld [vmem:[%s5 + $0x8] sm:$0xff]
      %v750 = vld [vmem:[%s5 + $0x10] sm:$0xff]
      %v751 = vld [vmem:[%s5 + $0x18] sm:$0xff]
      %v752 = vld [vmem:[%s5 + $0x20] sm:$0xff]
      %v753 = vld [vmem:[%s5 + $0x28] sm:$0xff]
      %v754 = vld [vmem:[%s5 + $0x30] sm:$0xff]
      %v755 = vld [vmem:[%s5 + $0x38] sm:$0xff]
      %v756 = vld [vmem:[%s6] sm:$0x1]
      %v758 = vperm.slane %v756, 0
      %v761 = vsel %vm562, %v732, 0
      %v764 = vsel %vm562, %v733, 0
      %v767 = vsel %vm562, %v734, 0
      %v770 = vsel %vm562, %v735, 0
      %v773 = vsel %vm562, %v736, 0
      %v776 = vsel %vm562, %v737, 0
      %v779 = vsel %vm562, %v738, 0
      %v782 = vsel %vm562, %v739, 0
      %v785 = vsel %vm562, %v740, 0
      %v788 = vsel %vm562, %v741, 0
      %v791 = vsel %vm562, %v742, 0
      %v794 = vsel %vm562, %v743, 0
      %v797 = vsel %vm562, %v744, 0
      %v800 = vsel %vm562, %v745, 0
      %v803 = vsel %vm562, %v746, 0
      %v806 = vsel %vm562, %v747, 0
      %v809 = vsel %vm562, %v748, 0
      %v812 = vsel %vm562, %v749, 0
      %v815 = vsel %vm562, %v750, 0
      %v818 = vsel %vm562, %v751, 0
      %v821 = vsel %vm562, %v752, 0
      %v824 = vsel %vm562, %v753, 0
      %v827 = vsel %vm562, %v754, 0
      %v830 = vsel %vm562, %v755, 0
      %832 = vmatpush.xpose.msra.mxu0 0.0
      %833 = vmatpush.xpose.msra.mxu0 0.0
      %834 = vmatpush.xpose.msra.mxu0 0.0
      %835 = vmatpush.xpose.msra.mxu0 0.0
      %836 = vmatpush.xpose.msra.mxu0 0.0
      %837 = vmatpush.xpose.msra.mxu0 0.0
      %838 = vmatpush.xpose.msra.mxu0 0.0
      %839 = vmatpush.xpose.msra.mxu0 0.0
      %840 = vmatpush.xpose.msra.mxu0 %v830
      %841 = vmatpush.xpose.msra.mxu0 %v827
      %842 = vmatpush.xpose.msra.mxu0 %v824
      %843 = vmatpush.xpose.msra.mxu0 %v821
      %844 = vmatpush.xpose.msra.mxu0 %v818
      %845 = vmatpush.xpose.msra.mxu0 %v815
      %846 = vmatpush.xpose.msra.mxu0 %v812
      %847 = vmatpush.xpose.msra.mxu0 %v809
      %848 = vmatmul.f32.gmra.mxu0 %v761
      %v849 = vpop.f32.mrf.mxu0
      %v850 = vadd.f32 %v758, %v849
      %851 = vmatmul.f32.gmra.mxu0 %v764
      %v852 = vpop.f32.mrf.mxu0
      %v853 = vadd.f32 %v758, %v852
      %854 = vmatmul.f32.gmra.mxu0 %v767
      %v855 = vpop.f32.mrf.mxu0
      %v856 = vadd.f32 %v758, %v855
      %857 = vmatmul.f32.gmra.mxu0 %v770
      %v858 = vpop.f32.mrf.mxu0
      %v859 = vadd.f32 %v758, %v858
      %860 = vmatmul.f32.gmra.mxu0 %v773
      %v861 = vpop.f32.mrf.mxu0
      %v862 = vadd.f32 %v758, %v861
      %863 = vmatmul.f32.gmra.mxu0 %v776
      %v864 = vpop.f32.mrf.mxu0
      %v865 = vadd.f32 %v758, %v864
      %866 = vmatmul.f32.gmra.mxu0 %v779
      %v867 = vpop.f32.mrf.mxu0
      %v868 = vadd.f32 %v758, %v867
      %869 = vmatmul.f32.gmra.mxu0 %v782
      %v870 = vpop.f32.mrf.mxu0
      %v871 = vadd.f32 %v758, %v870
      %872 = vmatmul.f32.gmra.mxu0 %v785
      %v873 = vpop.f32.mrf.mxu0
      %v874 = vadd.f32 %v758, %v873
      %875 = vmatmul.f32.gmra.mxu0 %v788
      %v876 = vpop.f32.mrf.mxu0
      %v877 = vadd.f32 %v758, %v876
      %878 = vmatmul.f32.gmra.mxu0 %v791
      %v879 = vpop.f32.mrf.mxu0
      %v880 = vadd.f32 %v758, %v879
      %881 = vmatmul.f32.gmra.mxu0 %v794
      %v882 = vpop.f32.mrf.mxu0
      %v883 = vadd.f32 %v758, %v882
      %884 = vmatmul.f32.gmra.mxu0 %v797
      %v885 = vpop.f32.mrf.mxu0
      %v886 = vadd.f32 %v758, %v885
      %887 = vmatmul.f32.gmra.mxu0 %v800
      %v888 = vpop.f32.mrf.mxu0
      %v889 = vadd.f32 %v758, %v888
      %890 = vmatmul.f32.gmra.mxu0 %v803
      %v891 = vpop.f32.mrf.mxu0
      %v892 = vadd.f32 %v758, %v891
      %893 = vmatmul.f32.gmra.mxu0 %v806
      %v894 = vpop.f32.mrf.mxu0
      %v895 = vadd.f32 %v758, %v894
      %896 = vdwg.mxu0
      %vm897 = vcmp.gt.f32.partialorder %v850, 0.0
      %vm898 = vcmp.gt.f32.partialorder %v853, 0.0
      %vm899 = vcmp.gt.f32.partialorder %v856, 0.0
      %vm900 = vcmp.gt.f32.partialorder %v859, 0.0
      %vm901 = vcmp.gt.f32.partialorder %v862, 0.0
      %vm902 = vcmp.gt.f32.partialorder %v865, 0.0
      %vm903 = vcmp.gt.f32.partialorder %v868, 0.0
      %vm904 = vcmp.gt.f32.partialorder %v871, 0.0
      %vm905 = vcmp.gt.f32.partialorder %v874, 0.0
      %vm906 = vcmp.gt.f32.partialorder %v877, 0.0
      %vm907 = vcmp.gt.f32.partialorder %v880, 0.0
      %vm908 = vcmp.gt.f32.partialorder %v883, 0.0
      %vm909 = vcmp.gt.f32.partialorder %v886, 0.0
      %vm910 = vcmp.gt.f32.partialorder %v889, 0.0
      %vm911 = vcmp.gt.f32.partialorder %v892, 0.0
      %vm912 = vcmp.gt.f32.partialorder %v895, 0.0
      %v913 = vmul.f32 %v850, 0.01
      %v914 = vmul.f32 %v853, 0.01
      %v915 = vmul.f32 %v856, 0.01
      %v916 = vmul.f32 %v859, 0.01
      %v917 = vmul.f32 %v862, 0.01
      %v918 = vmul.f32 %v865, 0.01
      %v919 = vmul.f32 %v868, 0.01
      %v920 = vmul.f32 %v871, 0.01
      %v921 = vmul.f32 %v874, 0.01
      %v922 = vmul.f32 %v877, 0.01
      %v923 = vmul.f32 %v880, 0.01
      %v924 = vmul.f32 %v883, 0.01
      %v925 = vmul.f32 %v886, 0.01
      %v926 = vmul.f32 %v889, 0.01
      %v927 = vmul.f32 %v892, 0.01
      %v928 = vmul.f32 %v895, 0.01
      %v929 = vsel %vm897, %v850, %v913
      %v930 = vsel %vm898, %v853, %v914
      %v931 = vsel %vm899, %v856, %v915
      %v932 = vsel %vm900, %v859, %v916
      %v933 = vsel %vm901, %v862, %v917
      %v934 = vsel %vm902, %v865, %v918
      %v935 = vsel %vm903, %v868, %v919
      %v936 = vsel %vm904, %v871, %v920
      %v937 = vsel %vm905, %v874, %v921
      %v938 = vsel %vm906, %v877, %v922
      %v939 = vsel %vm907, %v880, %v923
      %v940 = vsel %vm908, %v883, %v924
      %v941 = vsel %vm909, %v886, %v925
      %v942 = vsel %vm910, %v889, %v926
      %v943 = vsel %vm911, %v892, %v927
      %v944 = vsel %vm912, %v895, %v928
      %v945 = vld [vmem:[%s7] sm:$0xff]
      %v946 = vld [vmem:[%s7 + $0x8] sm:$0x3]
      %v947 = vld [vmem:[%s8] sm:$0x1]
      %v949 = vperm.slane %v947, 0
      %v952 = vsel %vm562, %v929, 0
      %v955 = vsel %vm562, %v930, 0
      %v958 = vsel %vm562, %v931, 0
      %v961 = vsel %vm562, %v932, 0
      %v964 = vsel %vm562, %v933, 0
      %v967 = vsel %vm562, %v934, 0
      %v970 = vsel %vm562, %v935, 0
      %v973 = vsel %vm562, %v936, 0
      %v976 = vsel %vm562, %v937, 0
      %v979 = vsel %vm562, %v938, 0
      %v982 = vsel %vm562, %v939, 0
      %v985 = vsel %vm562, %v940, 0
      %v988 = vsel %vm562, %v941, 0
      %v991 = vsel %vm562, %v942, 0
      %v994 = vsel %vm562, %v943, 0
      %v997 = vsel %vm562, %v944, 0
      %v1000 = vsel %vm562, %v945, 0
      %v1003 = vsel %vm562, %v946, 0
      %1005 = vmatpush.xpose.msra.mxu0 0.0
      %1006 = vmatpush.xpose.msra.mxu0 0.0
      %1007 = vmatpush.xpose.msra.mxu0 0.0
      %1008 = vmatpush.xpose.msra.mxu0 0.0
      %1009 = vmatpush.xpose.msra.mxu0 0.0
      %1010 = vmatpush.xpose.msra.mxu0 0.0
      %1011 = vmatpush.xpose.msra.mxu0 0.0
      %1012 = vmatpush.xpose.msra.mxu0 0.0
      %1013 = vmatpush.xpose.msra.mxu0 0.0
      %1014 = vmatpush.xpose.msra.mxu0 0.0
      %1015 = vmatpush.xpose.msra.mxu0 0.0
      %1016 = vmatpush.xpose.msra.mxu0 0.0
      %1017 = vmatpush.xpose.msra.mxu0 0.0
      %1018 = vmatpush.xpose.msra.mxu0 0.0
      %1019 = vmatpush.xpose.msra.mxu0 %v1003
      %1020 = vmatpush.xpose.msra.mxu0 %v1000
      %1021 = vmatmul.f32.gmra.mxu0 %v952
      %v1022 = vpop.f32.mrf.mxu0
      %v1023 = vadd.f32 %v949, %v1022
      %1024 = vmatmul.f32.gmra.mxu0 %v955
      %v1025 = vpop.f32.mrf.mxu0
      %v1026 = vadd.f32 %v949, %v1025
      %1027 = vmatmul.f32.gmra.mxu0 %v958
      %v1028 = vpop.f32.mrf.mxu0
      %v1029 = vadd.f32 %v949, %v1028
      %1030 = vmatmul.f32.gmra.mxu0 %v961
      %v1031 = vpop.f32.mrf.mxu0
      %v1032 = vadd.f32 %v949, %v1031
      %1033 = vmatmul.f32.gmra.mxu0 %v964
      %v1034 = vpop.f32.mrf.mxu0
      %v1035 = vadd.f32 %v949, %v1034
      %1036 = vmatmul.f32.gmra.mxu0 %v967
      %v1037 = vpop.f32.mrf.mxu0
      %v1038 = vadd.f32 %v949, %v1037
      %1039 = vmatmul.f32.gmra.mxu0 %v970
      %v1040 = vpop.f32.mrf.mxu0
      %v1041 = vadd.f32 %v949, %v1040
      %1042 = vmatmul.f32.gmra.mxu0 %v973
      %v1043 = vpop.f32.mrf.mxu0
      %v1044 = vadd.f32 %v949, %v1043
      %1045 = vmatmul.f32.gmra.mxu0 %v976
      %v1046 = vpop.f32.mrf.mxu0
      %v1047 = vadd.f32 %v949, %v1046
      %1048 = vmatmul.f32.gmra.mxu0 %v979
      %v1049 = vpop.f32.mrf.mxu0
      %v1050 = vadd.f32 %v949, %v1049
      %1051 = vmatmul.f32.gmra.mxu0 %v982
      %v1052 = vpop.f32.mrf.mxu0
      %v1053 = vadd.f32 %v949, %v1052
      %1054 = vmatmul.f32.gmra.mxu0 %v985
      %v1055 = vpop.f32.mrf.mxu0
      %v1056 = vadd.f32 %v949, %v1055
      %1057 = vmatmul.f32.gmra.mxu0 %v988
      %v1058 = vpop.f32.mrf.mxu0
      %v1059 = vadd.f32 %v949, %v1058
      %1060 = vmatmul.f32.gmra.mxu0 %v991
      %v1061 = vpop.f32.mrf.mxu0
      %v1062 = vadd.f32 %v949, %v1061
      %1063 = vmatmul.f32.gmra.mxu0 %v994
      %v1064 = vpop.f32.mrf.mxu0
      %v1065 = vadd.f32 %v949, %v1064
      %1066 = vmatmul.f32.gmra.mxu0 %v997
      %v1067 = vpop.f32.mrf.mxu0
      %v1068 = vadd.f32 %v949, %v1067
      %1069 = vdwg.mxu0
      %vm1070 = vcmask 80896
      %1071 = vst.msk [vmem:[%s334] sm:$0xff] %vm1070, %v1023
      %1072 = vst.msk [vmem:[%s334 + $0x8] sm:$0xff] %vm1070, %v1026
      %1073 = vst.msk [vmem:[%s334 + $0x10] sm:$0xff] %vm1070, %v1029
      %1074 = vst.msk [vmem:[%s334 + $0x18] sm:$0xff] %vm1070, %v1032
      %1075 = vst.msk [vmem:[%s334 + $0x20] sm:$0xff] %vm1070, %v1035
      %1076 = vst.msk [vmem:[%s334 + $0x28] sm:$0xff] %vm1070, %v1038
      %1077 = vst.msk [vmem:[%s334 + $0x30] sm:$0xff] %vm1070, %v1041
      %1078 = vst.msk [vmem:[%s334 + $0x38] sm:$0xff] %vm1070, %v1044
      %1079 = vst.msk [vmem:[%s334 + $0x40] sm:$0xff] %vm1070, %v1047
      %1080 = vst.msk [vmem:[%s334 + $0x48] sm:$0xff] %vm1070, %v1050
      %1081 = vst.msk [vmem:[%s334 + $0x50] sm:$0xff] %vm1070, %v1053
      %1082 = vst.msk [vmem:[%s334 + $0x58] sm:$0xff] %vm1070, %v1056
      %1083 = vst.msk [vmem:[%s334 + $0x60] sm:$0xff] %vm1070, %v1059
      %1084 = vst.msk [vmem:[%s334 + $0x68] sm:$0xff] %vm1070, %v1062
      %1085 = vst.msk [vmem:[%s334 + $0x70] sm:$0xff] %vm1070, %v1065
      %1086 = vst.msk [vmem:[%s334 + $0x78] sm:$0xff] %vm1070, %v1068
      %s1087 = smul.u32 16, %s20
      %p1088 = scmp.lt.s32.totalorder %s1087, 31
      %s1089 = scalar_select %p1088, %s1087, 31
      %s1090 = smul.addr %s1089, 8
      %s1091 = scalar_lea.vmem %s9, %s1090
      // Predicated region
      $region57: #{classifier_forward.1} parent=55 // pred_check
        %p1092 = pneg %p232
      $region58: #{classifier_forward.1} parent=55 // pred_check_branch
        %1094 = sbr.rel (%p1092) target = $region60
      $region59: #{classifier_forward.1} parent=55 // pred_region
        %s1095 = smul.u32 16, %s20
      $region60: #{classifier_forward.1} parent=55 // pred_fallthru
        _
    $region56: #{classifier_forward.1} parent=5 // pred_fallthru
      _
    %p1096 = scmp.le.s32.totalorder 2, %s15
    // Predicated region
    $region61: #{classifier_forward.1} parent=5 // pred_check
      %p1097 = pneg %p1096
    $region62: #{classifier_forward.1} parent=5 // pred_check_branch
      %1099 = sbr.rel (%p1097) target = $region64
    $region63: #{classifier_forward.1} parent=5 // pred_region
      %s1100 = ssub.s32 %s15, 2
      // Predicated region
      $region65: #{classifier_forward.1} parent=63 // pred_check
        %p1101 = pneg %p238
      $region66: #{classifier_forward.1} parent=63 // pred_check_branch
        %1103 = sbr.rel (%p1101) target = $region68
      $region67: #{classifier_forward.1} parent=63 // pred_region
        %s1104 = smul.u32 16, %s21
        %p1105 = scmp.lt.s32.totalorder %s1104, 31
        %s1106 = scalar_select %p1105, %s1104, 31
        %s1107 = smul.addr %s1106, 8
        %s1108 = scalar_lea.vmem %s9, %s1107
      $region68: #{classifier_forward.1} parent=63 // pred_fallthru
        _
    $region64: #{classifier_forward.1} parent=5 // pred_fallthru
      _
  $region6: #{classifier_forward.1} parent=0 // loop_footer
    %s19 = sadd.s32 1, %s15
  $region7: #{classifier_forward.1} parent=0 // loop_footer_branch
    %14 = sbr.rel target = $region3
  $region8: #{classifier_forward.1} parent=0 // loop_exit
    _

</llo_original>
